<compile_context>
chip_gen: v7x
topology: tpu7x:2x2x1
jax: 0.10.0
libtpu: 0.0.40
codegen_flags: <defaults>
</compile_context>

<pallas_src>
import numpy as np
import jax
import jax.numpy as jnp
from jax.experimental import pallas as pl
from jax.experimental.pallas import tpu as pltpu


LANE = 128


# ----------------------------- diffusion schedule (numpy glue) -----------------------------

def cosine_beta_schedule(timesteps, s=0.008):
    steps = timesteps + 1
    x = np.linspace(0, steps, steps)
    alphas_cumprod = np.cos((x / steps + s) / (1 + s) * np.pi * 0.5) ** 2
    alphas_cumprod = alphas_cumprod / alphas_cumprod[0]
    betas = 1 - alphas_cumprod[1:] / alphas_cumprod[:-1]
    return np.clip(betas, a_min=0, a_max=0.999)


def _round_up(x, m):
    return ((x + m - 1) // m) * m


# ----------------------------------- Pallas kernel body ------------------------------------

def diffusion_loss_kernel(mel_ref,     # VMEM [TR, Mp] f32   tgt_mels rows
                          noise_ref,   # VMEM [TR, Mp] f32   gaussian noise rows
                          cond_ref,    # VMEM [TR, Cp] bf16  decoder_inp (cond) rows
                          a_ref,       # VMEM [TR, 1]  f32   sqrt_alphas_cumprod[t] per row
                          b_ref,       # VMEM [TR, 1]  f32   sqrt_1m_alphas_cumprod[t] per row
                          temb_ref,    # VMEM [TR, Hp] f32   time embedding per row
                          scale_ref,   # VMEM [1, Mp]  f32   norm_spec scale (0 in padded lanes)
                          bias_ref,    # VMEM [1, Mp]  f32   norm_spec bias  (0 in padded lanes)
                          w_in_ref,    # VMEM [Mp+Cp, Hp] bf16  fused [w1; wc]
                          w2_ref,      # VMEM [Hp, Mp] bf16
                          out_ref):    # VMEM [1, Mp]  f32   per-tile partial |noise - x_recon| sums
    x = mel_ref[...]                                   # [TR, Mp] f32
    noise = noise_ref[...]                             # [TR, Mp] f32

    # ---- norm_spec as a single FMA (divide hoisted to glue) ----
    x_norm = x * scale_ref[...] + bias_ref[...]

    # ---- q_sample: a_t * x + b_t * noise (per-row coefficients broadcast over lanes) ----
    x_noisy = a_ref[...] * x_norm + b_ref[...] * noise  # [TR, Mp] f32

    # ---- denoise_fn(x_noisy, t, cond): synthetic per-frame MLP on the MXU (bf16 operands) ----
    # TODO(synk): real denoise_fn is an external WaveNet-style DiffNet; this deterministic
    # MLP stands in so the matmul hot path lives inside the kernel.
    xz = jnp.concatenate([x_noisy.astype(jnp.bfloat16), cond_ref[...]], axis=-1)  # [TR, Mp+Cp]
    h = jnp.dot(xz, w_in_ref[...], preferred_element_type=jnp.float32)            # [TR, Hp] f32
    h = jnp.maximum(h + temb_ref[...], 0.0)
    x_recon = jnp.dot(h.astype(jnp.bfloat16), w2_ref[...],
                      preferred_element_type=jnp.float32)                          # [TR, Mp] f32

    # ---- L1 partial sum: sublane (row) reduce only; cross-lane reduce + mean happen in glue ----
    out_ref[...] = jnp.sum(jnp.abs(noise - x_recon), axis=0, keepdims=True)        # [1, Mp]


# --------------------------------------- wrapper -------------------------------------------

def gaussian_diffusion_loss(tgt_mels, decoder_inp, t, noise, temb,
                            spec_min, spec_max, w1, wc, w2,
                            sqrt_alphas_cumprod, sqrt_one_minus_alphas_cumprod,
                            row_tile=256):
    """Training branch of GaussianDiffusion.forward: returns ret['diff_loss'] (scalar)."""
    B, T, M = tgt_mels.shape
    C = decoder_inp.shape[-1]
    H = w1.shape[-1]
    f32, bf16 = jnp.float32, jnp.bfloat16

    # Lane-dense padding targets (128 lanes) and row tiling of the flattened [B*T, *] slab.
    Mp = _round_up(M, LANE)
    Cp = _round_up(C, LANE)
    Hp = _round_up(H, LANE)
    R = B * T
    TR = min(_round_up(R, 8), row_tile)
    R_pad = _round_up(R, TR)
    n_tiles = R_pad // TR

    # ---- glue: extract(...) gather + per-row broadcast of diffusion coefficients ----
    a_rows = jnp.repeat(sqrt_alphas_cumprod[t].astype(f32), T)[:, None]          # [R, 1]
    b_rows = jnp.repeat(sqrt_one_minus_alphas_cumprod[t].astype(f32), T)[:, None]

    # ---- glue: norm_spec affine  (x - smin)/(smax - smin)*2 - 1  ==  x*scale + bias ----
    smin = spec_min.reshape(1, M).astype(f32)
    smax = spec_max.reshape(1, M).astype(f32)
    scale = 2.0 / (smax - smin)
    bias = -(2.0 * smin / (smax - smin) + 1.0)

    # ---- flatten [B, T, *] -> [B*T, *] and zero-pad rows/lanes (zeros contribute 0 loss) ----
    def pad_rows_lanes(x2d, lanes):
        r, c = x2d.shape
        return jnp.pad(x2d, ((0, R_pad - r), (0, lanes - c)))

    mel_p = pad_rows_lanes(tgt_mels.reshape(R, M).astype(f32), Mp)
    noise_p = pad_rows_lanes(noise.reshape(R, M).astype(f32), Mp)
    cond_p = pad_rows_lanes(decoder_inp.reshape(R, C).astype(f32), Cp).astype(bf16)
    temb_rows = jnp.broadcast_to(temb.reshape(B, 1, H), (B, T, H)).reshape(R, H)
    temb_p = pad_rows_lanes(temb_rows.astype(f32), Hp)
    a_p = jnp.pad(a_rows, ((0, R_pad - R), (0, 0)))
    b_p = jnp.pad(b_rows, ((0, R_pad - R), (0, 0)))
    scale_p = jnp.pad(scale, ((0, 0), (0, Mp - M)))   # padded lanes -> 0 (no inf/NaN)
    bias_p = jnp.pad(bias, ((0, 0), (0, Mp - M)))

    # ---- fuse [w1; wc] into one [Mp+Cp, Hp] weight; bf16 for the MXU ----
    w1_p = jnp.pad(w1.astype(f32), ((0, Mp - M), (0, Hp - H)))
    wc_p = jnp.pad(wc.astype(f32), ((0, Cp - C), (0, Hp - H)))
    w_in = jnp.concatenate([w1_p, wc_p], axis=0).astype(bf16)        # [Mp+Cp, Hp]
    w2_p = jnp.pad(w2.astype(f32), ((0, Hp - H), (0, Mp - M))).astype(bf16)

    partials = pl.pallas_call(
        diffusion_loss_kernel,
        out_shape=jax.ShapeDtypeStruct((n_tiles, Mp), f32),
        grid=(n_tiles,),
        in_specs=[
            pl.BlockSpec((TR, Mp), lambda i: (i, 0)),        # tgt_mels rows
            pl.BlockSpec((TR, Mp), lambda i: (i, 0)),        # noise rows
            pl.BlockSpec((TR, Cp), lambda i: (i, 0)),        # cond rows (bf16)
            pl.BlockSpec((TR, 1), lambda i: (i, 0)),         # sqrt_ac[t] per row
            pl.BlockSpec((TR, 1), lambda i: (i, 0)),         # sqrt_1m_ac[t] per row
            pl.BlockSpec((TR, Hp), lambda i: (i, 0)),        # time embedding per row
            pl.BlockSpec((1, Mp), lambda i: (0, 0)),         # norm_spec scale
            pl.BlockSpec((1, Mp), lambda i: (0, 0)),         # norm_spec bias
            pl.BlockSpec((Mp + Cp, Hp), lambda i: (0, 0)),   # fused [w1; wc] (bf16)
            pl.BlockSpec((Hp, Mp), lambda i: (0, 0)),        # w2 (bf16)
        ],
        out_specs=pl.BlockSpec((1, Mp), lambda i: (i, 0)),   # lane-dense per-tile partials
        compiler_params=pltpu.CompilerParams(
            dimension_semantics=("parallel",)),              # no accumulator -> safe on 2-TC chips
    )(mel_p, noise_p, cond_p, a_p, b_p, temb_p, scale_p, bias_p, w_in, w2_p)

    # Final cross-lane reduce + mean over the TRUE (unpadded) element count.
    return jnp.sum(partials) / jnp.float32(B * T * M)


# ------------------------------------------ main -------------------------------------------

if __name__ == "__main__":
    # Small, forward-consistent shapes.
    B, T, M = 2, 16, 32          # batch, mel frames, mel bins (out_dims / keep_bins)
    C, H = 32, 32                # cond channels (decoder_inp hidden), denoiser hidden
    timesteps = 1000
    K_step = 1000

    # Diffusion buffers (deterministic, numpy — same as module __init__).
    betas = cosine_beta_schedule(timesteps)
    alphas_cumprod = np.cumprod(1.0 - betas, axis=0)
    sqrt_ac = jnp.asarray(np.sqrt(alphas_cumprod), dtype=jnp.float32)
    sqrt_1m_ac = jnp.asarray(np.sqrt(1.0 - alphas_cumprod), dtype=jnp.float32)

    # spec_min / spec_max buffers, deterministic.
    spec_min = jnp.linspace(-6.0, -5.0, M, dtype=jnp.float32).reshape(1, 1, M)
    spec_max = jnp.linspace(0.0, 1.0, M, dtype=jnp.float32).reshape(1, 1, M)

    # Deterministic synthetic denoiser weights.
    # TODO(synk): stands in for the external denoise_fn (DiffNet); shapes are a choice.
    key = jax.random.PRNGKey(0)
    k_mel, k_cond, k_noise, k_t, k_w1, k_wc, k_w2 = jax.random.split(key, 7)
    w1 = jax.random.normal(k_w1, (M, H), dtype=jnp.float32) * 0.1
    wc = jax.random.normal(k_wc, (C, H), dtype=jnp.float32) * 0.1
    w2 = jax.random.normal(k_w2, (H, M), dtype=jnp.float32) * 0.1

    # Inputs.
    tgt_mels = jax.random.normal(k_mel, (B, T, M), dtype=jnp.float32) * 2.0 - 3.0   # [B, T, M]
    decoder_inp = jax.random.normal(k_cond, (B, T, C), dtype=jnp.float32)            # cond (pre-transpose)
    # t ~ randint(0, K_step, (B,))
    t = jax.random.randint(k_t, (B,), 0, K_step, dtype=jnp.int32)
    # noise = randn_like(x) with x in NCHW [B, 1, M, T]; kernel layout uses the [B, T, M] view.
    noise_nchw = jax.random.normal(k_noise, (B, 1, M, T), dtype=jnp.float32)
    noise_btm = jnp.transpose(noise_nchw[:, 0], (0, 2, 1))                            # [B, T, M]
    # Deterministic time embedding for the synthetic denoiser.
    temb = jnp.sin(t.astype(jnp.float32)[:, None] *
                   (jnp.arange(1, H + 1, dtype=jnp.float32) / H)).reshape(B, 1, H)

    loss = jax.jit(gaussian_diffusion_loss)(tgt_mels, decoder_inp, t, noise_btm, temb,
                                            spec_min, spec_max, w1, wc, w2,
                                            sqrt_ac, sqrt_1m_ac)
    loss = jax.block_until_ready(loss)

    # Pure-JAX reference of the original module math (matmul operands in bf16 to mirror the
    # kernel's MXU dtype; everything else f32).
    smin = spec_min[0, 0]
    smax = spec_max[0, 0]
    x_norm = (tgt_mels - smin) / (smax - smin) * 2.0 - 1.0
    a = sqrt_ac[t][:, None, None]
    bco = sqrt_1m_ac[t][:, None, None]
    x_noisy = a * x_norm + bco * noise_btm
    h = jnp.einsum('btm,mh->bth', x_noisy.astype(jnp.bfloat16), w1.astype(jnp.bfloat16),
                   preferred_element_type=jnp.float32)
    h = h + jnp.einsum('btc,ch->bth', decoder_inp.astype(jnp.bfloat16), wc.astype(jnp.bfloat16),
                       preferred_element_type=jnp.float32)
    h = jnp.maximum(h + temb, 0.0)
    x_recon = jnp.einsum('bth,hm->btm', h.astype(jnp.bfloat16), w2.astype(jnp.bfloat16),
                         preferred_element_type=jnp.float32)
    ref_loss = jnp.mean(jnp.abs(noise_btm - x_recon))

    np.testing.assert_allclose(np.asarray(loss), np.asarray(ref_loss), rtol=2e-3, atol=2e-4)
    print("KERNEL_OK")
</pallas_src>

<mosaic_0001>
module attributes {stable_mosaic.version = 11 : i64} {
  func.func @diffusion_loss_kernel(%arg0: i32, %arg1: memref<32x128xf32, #tpu.memory_space<vmem>>, %arg2: memref<32x128xf32, #tpu.memory_space<vmem>>, %arg3: memref<32x128xbf16, #tpu.memory_space<vmem>>, %arg4: memref<32x1xf32, #tpu.memory_space<vmem>>, %arg5: memref<32x1xf32, #tpu.memory_space<vmem>>, %arg6: memref<32x128xf32, #tpu.memory_space<vmem>>, %arg7: memref<1x128xf32, #tpu.memory_space<vmem>>, %arg8: memref<1x128xf32, #tpu.memory_space<vmem>>, %arg9: memref<256x128xbf16, #tpu.memory_space<vmem>>, %arg10: memref<128x128xbf16, #tpu.memory_space<vmem>>, %arg11: memref<1x128xf32, #tpu.memory_space<vmem>>) attributes {dimension_semantics = [#tpu.dimension_semantics<parallel>], iteration_bounds = array<i64: 1>, scalar_prefetch = 0 : i64, scratch_operands = 0 : i64, tpu.core_type = #tpu.core_type<tc>, window_params = [{transform_indices = @transform_0, window_bounds = array<i64: 32, 128>}, {transform_indices = @transform_1, window_bounds = array<i64: 32, 128>}, {transform_indices = @transform_2, window_bounds = array<i64: 32, 128>}, {transform_indices = @transform_3, window_bounds = array<i64: 32, 1>}, {transform_indices = @transform_4, window_bounds = array<i64: 32, 1>}, {transform_indices = @transform_5, window_bounds = array<i64: 32, 128>}, {pipeline_mode = #tpu.pipeline_mode<synchronous>, transform_indices = @transform_6, window_bounds = array<i64: 1, 128>}, {pipeline_mode = #tpu.pipeline_mode<synchronous>, transform_indices = @transform_7, window_bounds = array<i64: 1, 128>}, {pipeline_mode = #tpu.pipeline_mode<synchronous>, transform_indices = @transform_8, window_bounds = array<i64: 256, 128>}, {pipeline_mode = #tpu.pipeline_mode<synchronous>, transform_indices = @transform_9, window_bounds = array<i64: 128, 128>}, {transform_indices = @transform_10, window_bounds = array<i64: 1, 128>}]} {
    %c0 = arith.constant 0 : index
    %c0_0 = arith.constant 0 : index
    %0 = vector.load %arg1[%c0, %c0_0] : memref<32x128xf32, #tpu.memory_space<vmem>>, vector<32x128xf32>
    %c0_1 = arith.constant 0 : index
    %c0_2 = arith.constant 0 : index
    %1 = vector.load %arg2[%c0_1, %c0_2] : memref<32x128xf32, #tpu.memory_space<vmem>>, vector<32x128xf32>
    %c0_3 = arith.constant 0 : index
    %c0_4 = arith.constant 0 : index
    %2 = vector.load %arg7[%c0_3, %c0_4] : memref<1x128xf32, #tpu.memory_space<vmem>>, vector<1x128xf32>
    %3 = vector.broadcast %2 : vector<1x128xf32> to vector<32x128xf32>
    %4 = arith.mulf %0, %3 : vector<32x128xf32>
    %c0_5 = arith.constant 0 : index
    %c0_6 = arith.constant 0 : index
    %5 = vector.load %arg8[%c0_5, %c0_6] : memref<1x128xf32, #tpu.memory_space<vmem>>, vector<1x128xf32>
    %6 = vector.broadcast %5 : vector<1x128xf32> to vector<32x128xf32>
    %7 = arith.addf %4, %6 : vector<32x128xf32>
    %c0_7 = arith.constant 0 : index
    %c0_8 = arith.constant 0 : index
    %8 = vector.load %arg4[%c0_7, %c0_8] : memref<32x1xf32, #tpu.memory_space<vmem>>, vector<32x1xf32>
    %9 = vector.broadcast %8 : vector<32x1xf32> to vector<32x128xf32>
    %10 = arith.mulf %9, %7 : vector<32x128xf32>
    %c0_9 = arith.constant 0 : index
    %c0_10 = arith.constant 0 : index
    %11 = vector.load %arg5[%c0_9, %c0_10] : memref<32x1xf32, #tpu.memory_space<vmem>>, vector<32x1xf32>
    %12 = vector.broadcast %11 : vector<32x1xf32> to vector<32x128xf32>
    %13 = arith.mulf %12, %1 : vector<32x128xf32>
    %14 = arith.addf %10, %13 : vector<32x128xf32>
    %15 = arith.truncf %14 : vector<32x128xf32> to vector<32x128xbf16>
    %c0_11 = arith.constant 0 : index
    %c0_12 = arith.constant 0 : index
    %16 = vector.load %arg3[%c0_11, %c0_12] : memref<32x128xbf16, #tpu.memory_space<vmem>>, vector<32x128xbf16>
    %17 = tpu.concatenate %15, %16 in 1 : vector<32x128xbf16>, vector<32x128xbf16> -> vector<32x256xbf16>
    %c0_13 = arith.constant 0 : index
    %c0_14 = arith.constant 0 : index
    %18 = vector.load %arg9[%c0_13, %c0_14] : memref<256x128xbf16, #tpu.memory_space<vmem>>, vector<256x128xbf16>
    %cst = arith.constant dense<0.000000e+00> : vector<32x128xf32>
    %19 = tpu.matmul %17, %18, %cst {dimension_numbers = #tpu.dot_dimension_numbers<[1], [0], [0], [1], [0, 0, 1, 1], [], []>} : vector<32x256xbf16>, vector<256x128xbf16>, vector<32x128xf32> -> vector<32x128xf32>
    %c0_15 = arith.constant 0 : index
    %c0_16 = arith.constant 0 : index
    %20 = vector.load %arg6[%c0_15, %c0_16] : memref<32x128xf32, #tpu.memory_space<vmem>>, vector<32x128xf32>
    %21 = arith.addf %19, %20 : vector<32x128xf32>
    %cst_17 = arith.constant 0.000000e+00 : f32
    %22 = vector.broadcast %cst_17 : f32 to vector<32x128xf32>
    %23 = arith.maximumf %21, %22 : vector<32x128xf32>
    %24 = arith.truncf %23 : vector<32x128xf32> to vector<32x128xbf16>
    %c0_18 = arith.constant 0 : index
    %c0_19 = arith.constant 0 : index
    %25 = vector.load %arg10[%c0_18, %c0_19] : memref<128x128xbf16, #tpu.memory_space<vmem>>, vector<128x128xbf16>
    %cst_20 = arith.constant dense<0.000000e+00> : vector<32x128xf32>
    %26 = tpu.matmul %24, %25, %cst_20 {dimension_numbers = #tpu.dot_dimension_numbers<[1], [0], [0], [1], [0, 0, 1, 1], [], []>} : vector<32x128xbf16>, vector<128x128xbf16>, vector<32x128xf32> -> vector<32x128xf32>
    %27 = arith.subf %1, %26 : vector<32x128xf32>
    %28 = math.absf %27 : vector<32x128xf32>
    %cst_21 = arith.constant dense<0.000000e+00> : vector<128xf32>
    %29 = vector.multi_reduction <add>, %28, %cst_21 [0] : vector<32x128xf32> to vector<128xf32>
    %30 = vector.shape_cast %29 : vector<128xf32> to vector<1x128xf32>
    %c0_22 = arith.constant 0 : index
    %c0_23 = arith.constant 0 : index
    %31 = vector.load %arg11[%c0_22, %c0_23] : memref<1x128xf32, #tpu.memory_space<vmem>>, vector<1x128xf32>
    tpu.vector_store %arg11[%c0_22, %c0_23], %30 {strides = array<i32>} : memref<1x128xf32, #tpu.memory_space<vmem>>, vector<1x128xf32>,
    return
  }
  func.func @transform_0(%arg0: i32) -> (i32, i32) {
    %c0_i32 = arith.constant 0 : i32
    %c0_i32_0 = arith.constant 0 : i32
    return %arg0, %c0_i32 : i32, i32
  }
  func.func @transform_1(%arg0: i32) -> (i32, i32) {
    %c0_i32 = arith.constant 0 : i32
    %c0_i32_0 = arith.constant 0 : i32
    return %arg0, %c0_i32 : i32, i32
  }
  func.func @transform_2(%arg0: i32) -> (i32, i32) {
    %c0_i32 = arith.constant 0 : i32
    %c0_i32_0 = arith.constant 0 : i32
    return %arg0, %c0_i32 : i32, i32
  }
  func.func @transform_3(%arg0: i32) -> (i32, i32) {
    %c0_i32 = arith.constant 0 : i32
    %c0_i32_0 = arith.constant 0 : i32
    return %arg0, %c0_i32 : i32, i32
  }
  func.func @transform_4(%arg0: i32) -> (i32, i32) {
    %c0_i32 = arith.constant 0 : i32
    %c0_i32_0 = arith.constant 0 : i32
    return %arg0, %c0_i32 : i32, i32
  }
  func.func @transform_5(%arg0: i32) -> (i32, i32) {
    %c0_i32 = arith.constant 0 : i32
    %c0_i32_0 = arith.constant 0 : i32
    return %arg0, %c0_i32 : i32, i32
  }
  func.func @transform_6(%arg0: i32) -> (i32, i32) {
    %c0_i32 = arith.constant 0 : i32
    %c0_i32_0 = arith.constant 0 : i32
    %c0_i32_1 = arith.constant 0 : i32
    return %c0_i32, %c0_i32_0 : i32, i32
  }
  func.func @transform_7(%arg0: i32) -> (i32, i32) {
    %c0_i32 = arith.constant 0 : i32
    %c0_i32_0 = arith.constant 0 : i32
    %c0_i32_1 = arith.constant 0 : i32
    return %c0_i32, %c0_i32_0 : i32, i32
  }
  func.func @transform_8(%arg0: i32) -> (i32, i32) {
    %c0_i32 = arith.constant 0 : i32
    %c0_i32_0 = arith.constant 0 : i32
    %c0_i32_1 = arith.constant 0 : i32
    return %c0_i32, %c0_i32_0 : i32, i32
  }
  func.func @transform_9(%arg0: i32) -> (i32, i32) {
    %c0_i32 = arith.constant 0 : i32
    %c0_i32_0 = arith.constant 0 : i32
    %c0_i32_1 = arith.constant 0 : i32
    return %c0_i32, %c0_i32_0 : i32, i32
  }
  func.func @transform_10(%arg0: i32) -> (i32, i32) {
    %c0_i32 = arith.constant 0 : i32
    %c0_i32_0 = arith.constant 0 : i32
    return %arg0, %c0_i32 : i32, i32
  }
}

</mosaic_0001>

<llo_original>
// kernel: gaussian_diffusion_loss.1
$region0: #{gaussian_diffusion_loss.1}
  #allocation0 [shape = 'u32[]', space=smem, size = 0x4, offset = 0x4, fixed_abs, tag = 'smem constant byte address 0x4 - core index']
  #allocation1 [shape = 'u32[144,128]{1,0:T(1,128)}', space=vmem, size = 0x12000, scoped, tag = 'internal scratch']
  %s0 = inlined_call_operand.vmem [shape: f32[32,128], index: 0, kind: input, shape index: {}]
  %s1 = inlined_call_operand.vmem [shape: f32[32,128], index: 1, kind: input, shape index: {}]
  %s2 = inlined_call_operand.vmem [shape: bf16[32,128], index: 2, kind: input, shape index: {}]
  %s3 = inlined_call_operand.vmem [shape: f32[32,1], index: 3, kind: input, shape index: {}]
  %s4 = inlined_call_operand.vmem [shape: f32[32,1], index: 4, kind: input, shape index: {}]
  %s5 = inlined_call_operand.vmem [shape: f32[32,128], index: 5, kind: input, shape index: {}]
  %s6 = inlined_call_operand.vmem [shape: f32[1,128], index: 6, kind: input, shape index: {}]
  %s7 = inlined_call_operand.vmem [shape: f32[1,128], index: 7, kind: input, shape index: {}]
  %s8 = inlined_call_operand.vmem [shape: bf16[256,128], index: 8, kind: input, shape index: {}]
  %s9 = inlined_call_operand.vmem [shape: bf16[128,128], index: 9, kind: input, shape index: {}]
  %s10 = inlined_call_operand.vmem [shape: f32[1,128], index: 10, kind: output, shape index: {}]
  %s11 = sld [smem:[#allocation0]]
  $region50: #{gaussian_diffusion_loss.1} parent=0
    _
  %s13 = ssub.s32 1, %s11
  %s14 = scalar_select 0, %s13, %s11
  // Predicated region
  $region2: #{gaussian_diffusion_loss.1} parent=0 // pred_check
    _
  $region3: #{gaussian_diffusion_loss.1} parent=0 // pred_check_branch
    %16 = sbr.rel (0) target = $region5
  $region4: #{gaussian_diffusion_loss.1} parent=0 // pred_region
    _
  $region5: #{gaussian_diffusion_loss.1} parent=0 // pred_fallthru
    _
  // Predicated region
  $region6: #{gaussian_diffusion_loss.1} parent=0 // pred_check
    _
  $region7: #{gaussian_diffusion_loss.1} parent=0 // pred_check_branch
    %18 = sbr.rel (0) target = $region9
  $region8: #{gaussian_diffusion_loss.1} parent=0 // pred_region
    _
  $region9: #{gaussian_diffusion_loss.1} parent=0 // pred_fallthru
    _
  // Predicated region
  $region10: #{gaussian_diffusion_loss.1} parent=0 // pred_check
    _
  $region11: #{gaussian_diffusion_loss.1} parent=0 // pred_check_branch
    %20 = sbr.rel (0) target = $region13
  $region12: #{gaussian_diffusion_loss.1} parent=0 // pred_region
    _
  $region13: #{gaussian_diffusion_loss.1} parent=0 // pred_fallthru
    _
  // Predicated region
  $region14: #{gaussian_diffusion_loss.1} parent=0 // pred_check
    _
  $region15: #{gaussian_diffusion_loss.1} parent=0 // pred_check_branch
    %22 = sbr.rel (0) target = $region17
  $region16: #{gaussian_diffusion_loss.1} parent=0 // pred_region
    _
  $region17: #{gaussian_diffusion_loss.1} parent=0 // pred_fallthru
    _
  // Predicated region
  $region18: #{gaussian_diffusion_loss.1} parent=0 // pred_check
    _
  $region19: #{gaussian_diffusion_loss.1} parent=0 // pred_check_branch
    %24 = sbr.rel (0) target = $region21
  $region20: #{gaussian_diffusion_loss.1} parent=0 // pred_region
    _
  $region21: #{gaussian_diffusion_loss.1} parent=0 // pred_fallthru
    _
  // Predicated region
  $region22: #{gaussian_diffusion_loss.1} parent=0 // pred_check
    _
  $region23: #{gaussian_diffusion_loss.1} parent=0 // pred_check_branch
    %26 = sbr.rel (0) target = $region25
  $region24: #{gaussian_diffusion_loss.1} parent=0 // pred_region
    _
  $region25: #{gaussian_diffusion_loss.1} parent=0 // pred_fallthru
    _
  // Predicated region
  $region26: #{gaussian_diffusion_loss.1} parent=0 // pred_check
    _
  $region27: #{gaussian_diffusion_loss.1} parent=0 // pred_check_branch
    %28 = sbr.rel (0) target = $region29
  $region28: #{gaussian_diffusion_loss.1} parent=0 // pred_region
    _
  $region29: #{gaussian_diffusion_loss.1} parent=0 // pred_fallthru
    _
  // Predicated region
  $region30: #{gaussian_diffusion_loss.1} parent=0 // pred_check
    _
  $region31: #{gaussian_diffusion_loss.1} parent=0 // pred_check_branch
    %30 = sbr.rel (0) target = $region33
  $region32: #{gaussian_diffusion_loss.1} parent=0 // pred_region
    _
  $region33: #{gaussian_diffusion_loss.1} parent=0 // pred_fallthru
    _
  // Predicated region
  $region34: #{gaussian_diffusion_loss.1} parent=0 // pred_check
    _
  $region35: #{gaussian_diffusion_loss.1} parent=0 // pred_check_branch
    %32 = sbr.rel (0) target = $region37
  $region36: #{gaussian_diffusion_loss.1} parent=0 // pred_region
    _
  $region37: #{gaussian_diffusion_loss.1} parent=0 // pred_fallthru
    _
  // Predicated region
  $region38: #{gaussian_diffusion_loss.1} parent=0 // pred_check
    _
  $region39: #{gaussian_diffusion_loss.1} parent=0 // pred_check_branch
    %34 = sbr.rel (0) target = $region41
  $region40: #{gaussian_diffusion_loss.1} parent=0 // pred_region
    _
  $region41: #{gaussian_diffusion_loss.1} parent=0 // pred_fallthru
    _
  %v36 = vld [vmem:[%s0] sm:$0xff]
  %v37 = vld [vmem:[%s0 + $0x8] sm:$0xff]
  %v38 = vld [vmem:[%s0 + $0x10] sm:$0xff]
  %v39 = vld [vmem:[%s0 + $0x18] sm:$0xff]
  %v40 = vld [vmem:[%s1] sm:$0xff]
  %v41 = vld [vmem:[%s1 + $0x8] sm:$0xff]
  %v42 = vld [vmem:[%s1 + $0x10] sm:$0xff]
  %v43 = vld [vmem:[%s1 + $0x18] sm:$0xff]
  %v44 = vld [vmem:[%s6] sm:$0x1]
  %v46 = vlaneseq
  %v47 = vshrl.u32 %v46, 7
  %v48 = vsub.s32 0, %v47
  %v49 = vrot.slane %v44, %v48
  %v51 = vmul.f32 %v36, %v49
  %v52 = vmul.f32 %v37, %v49
  %v53 = vmul.f32 %v38, %v49
  %v54 = vmul.f32 %v39, %v49
  %v55 = vld [vmem:[%s7] sm:$0x1]
  %v57 = vlaneseq
  %v58 = vshrl.u32 %v57, 7
  %v59 = vsub.s32 0, %v58
  %v60 = vrot.slane %v55, %v59
  %v62 = vadd.f32 %v51, %v60
  %v63 = vadd.f32 %v52, %v60
  %v64 = vadd.f32 %v53, %v60
  %v65 = vadd.f32 %v54, %v60
  %v66 = vld [vmem:[%s3] sm:$0xff]
  %v67 = vld [vmem:[%s3 + $0x8] sm:$0xff]
  %v68 = vld [vmem:[%s3 + $0x10] sm:$0xff]
  %v69 = vld [vmem:[%s3 + $0x18] sm:$0xff]
  %71 = vset.pattern.permute.xlu0 0
  %72 = vperm.xlu0 %71, %v66
  %v73 = vpop.permute.xlu0 %72
  %76 = vset.pattern.permute.xlu0 0
  %77 = vperm.xlu0 %76, %v67
  %v78 = vpop.permute.xlu0 %77
  %81 = vset.pattern.permute.xlu0 0
  %82 = vperm.xlu0 %81, %v68
  %v83 = vpop.permute.xlu0 %82
  %86 = vset.pattern.permute.xlu0 0
  %87 = vperm.xlu0 %86, %v69
  %v88 = vpop.permute.xlu0 %87
  %v90 = vmul.f32 %v73, %v62
  %v91 = vmul.f32 %v78, %v63
  %v92 = vmul.f32 %v83, %v64
  %v93 = vmul.f32 %v88, %v65
  %v94 = vld [vmem:[%s4] sm:$0xff]
  %v95 = vld [vmem:[%s4 + $0x8] sm:$0xff]
  %v96 = vld [vmem:[%s4 + $0x10] sm:$0xff]
  %v97 = vld [vmem:[%s4 + $0x18] sm:$0xff]
  %99 = vset.pattern.permute.xlu0 0
  %100 = vperm.xlu0 %99, %v94
  %v101 = vpop.permute.xlu0 %100
  %104 = vset.pattern.permute.xlu0 0
  %105 = vperm.xlu0 %104, %v95
  %v106 = vpop.permute.xlu0 %105
  %109 = vset.pattern.permute.xlu0 0
  %110 = vperm.xlu0 %109, %v96
  %v111 = vpop.permute.xlu0 %110
  %114 = vset.pattern.permute.xlu0 0
  %115 = vperm.xlu0 %114, %v97
  %v116 = vpop.permute.xlu0 %115
  %v118 = vmul.f32 %v101, %v40
  %v119 = vmul.f32 %v106, %v41
  %v120 = vmul.f32 %v111, %v42
  %v121 = vmul.f32 %v116, %v43
  %v122 = vadd.f32 %v90, %v118
  %v123 = vadd.f32 %v91, %v119
  %v124 = vadd.f32 %v92, %v120
  %v125 = vadd.f32 %v93, %v121
  %v126 = vpack.c.bf16 %v123, %v122
  %v127 = vpack.c.bf16 %v125, %v124
  %v128 = vld [vmem:[%s2] sm:$0xf]
  %v129 = vld [vmem:[%s2 + $0x4] sm:$0xf]
  %v130 = vld [vmem:[%s2 + $0x8] sm:$0xf]
  %v131 = vld [vmem:[%s2 + $0xc] sm:$0xf]
  %v136 = vunpack.c.l.b16 %v128
  %v137 = vunpack.c.l.b16 %v129
  %v138 = vunpack.c.l.b16 %v130
  %v139 = vunpack.c.l.b16 %v131
  %v140 = vpack.c.b16 %v137, %v136
  %v141 = vpack.c.b16 %v139, %v138
  %v144 = vld [vmem:[%s8] sm:$0xf]
  %v145 = vld [vmem:[%s8 + $0x4] sm:$0xf]
  %v146 = vld [vmem:[%s8 + $0x8] sm:$0xf]
  %v147 = vld [vmem:[%s8 + $0xc] sm:$0xf]
  %v148 = vld [vmem:[%s8 + $0x10] sm:$0xf]
  %v149 = vld [vmem:[%s8 + $0x14] sm:$0xf]
  %v150 = vld [vmem:[%s8 + $0x18] sm:$0xf]
  %v151 = vld [vmem:[%s8 + $0x1c] sm:$0xf]
  %v152 = vld [vmem:[%s8 + $0x20] sm:$0xf]
  %v153 = vld [vmem:[%s8 + $0x24] sm:$0xf]
  %v154 = vld [vmem:[%s8 + $0x28] sm:$0xf]
  %v155 = vld [vmem:[%s8 + $0x2c] sm:$0xf]
  %v156 = vld [vmem:[%s8 + $0x30] sm:$0xf]
  %v157 = vld [vmem:[%s8 + $0x34] sm:$0xf]
  %v158 = vld [vmem:[%s8 + $0x38] sm:$0xf]
  %v159 = vld [vmem:[%s8 + $0x3c] sm:$0xf]
  %v160 = vld [vmem:[%s8 + $0x40] sm:$0xf]
  %v161 = vld [vmem:[%s8 + $0x44] sm:$0xf]
  %v162 = vld [vmem:[%s8 + $0x48] sm:$0xf]
  %v163 = vld [vmem:[%s8 + $0x4c] sm:$0xf]
  %v164 = vld [vmem:[%s8 + $0x50] sm:$0xf]
  %v165 = vld [vmem:[%s8 + $0x54] sm:$0xf]
  %v166 = vld [vmem:[%s8 + $0x58] sm:$0xf]
  %v167 = vld [vmem:[%s8 + $0x5c] sm:$0xf]
  %v168 = vld [vmem:[%s8 + $0x60] sm:$0xf]
  %v169 = vld [vmem:[%s8 + $0x64] sm:$0xf]
  %v170 = vld [vmem:[%s8 + $0x68] sm:$0xf]
  %v171 = vld [vmem:[%s8 + $0x6c] sm:$0xf]
  %v172 = vld [vmem:[%s8 + $0x70] sm:$0xf]
  %v173 = vld [vmem:[%s8 + $0x74] sm:$0xf]
  %v174 = vld [vmem:[%s8 + $0x78] sm:$0xf]
  %v175 = vld [vmem:[%s8 + $0x7c] sm:$0xf]
  %v176 = vld [vmem:[%s5] sm:$0xff]
  %v177 = vld [vmem:[%s5 + $0x8] sm:$0xff]
  %v178 = vld [vmem:[%s5 + $0x10] sm:$0xff]
  %v179 = vld [vmem:[%s5 + $0x18] sm:$0xff]
  %v212 = vunpack.c.l.b16 %v144
  %v213 = vunpack.c.l.b16 %v145
  %v214 = vunpack.c.l.b16 %v146
  %v215 = vunpack.c.l.b16 %v147
  %v216 = vunpack.c.l.b16 %v148
  %v217 = vunpack.c.l.b16 %v149
  %v218 = vunpack.c.l.b16 %v150
  %v219 = vunpack.c.l.b16 %v151
  %v220 = vunpack.c.l.b16 %v152
  %v221 = vunpack.c.l.b16 %v153
  %v222 = vunpack.c.l.b16 %v154
  %v223 = vunpack.c.l.b16 %v155
  %v224 = vunpack.c.l.b16 %v156
  %v225 = vunpack.c.l.b16 %v157
  %v226 = vunpack.c.l.b16 %v158
  %v227 = vunpack.c.l.b16 %v159
  %v228 = vunpack.c.l.b16 %v160
  %v229 = vunpack.c.l.b16 %v161
  %v230 = vunpack.c.l.b16 %v162
  %v231 = vunpack.c.l.b16 %v163
  %v232 = vunpack.c.l.b16 %v164
  %v233 = vunpack.c.l.b16 %v165
  %v234 = vunpack.c.l.b16 %v166
  %v235 = vunpack.c.l.b16 %v167
  %v236 = vunpack.c.l.b16 %v168
  %v237 = vunpack.c.l.b16 %v169
  %v238 = vunpack.c.l.b16 %v170
  %v239 = vunpack.c.l.b16 %v171
  %v240 = vunpack.c.l.b16 %v172
  %v241 = vunpack.c.l.b16 %v173
  %v242 = vunpack.c.l.b16 %v174
  %v243 = vunpack.c.l.b16 %v175
  %v244 = vpack.c.b16 %v213, %v212
  %v245 = vpack.c.b16 %v215, %v214
  %v246 = vpack.c.b16 %v217, %v216
  %v247 = vpack.c.b16 %v219, %v218
  %v248 = vpack.c.b16 %v221, %v220
  %v249 = vpack.c.b16 %v223, %v222
  %v250 = vpack.c.b16 %v225, %v224
  %v251 = vpack.c.b16 %v227, %v226
  %v252 = vpack.c.b16 %v229, %v228
  %v253 = vpack.c.b16 %v231, %v230
  %v254 = vpack.c.b16 %v233, %v232
  %v255 = vpack.c.b16 %v235, %v234
  %v256 = vpack.c.b16 %v237, %v236
  %v257 = vpack.c.b16 %v239, %v238
  %v258 = vpack.c.b16 %v241, %v240
  %v259 = vpack.c.b16 %v243, %v242
  %276 = vmatprep.subr.bf16.mxu0 0
  %277 = vmatpush1.bf16.msra.mxu0 %v244
  %278 = vmatprep.subr.bf16.mxu0 0
  %279 = vmatpush1.bf16.msra.mxu0 %v245
  %280 = vmatprep.subr.bf16.mxu0 0
  %281 = vmatpush1.bf16.msra.mxu0 %v246
  %282 = vmatprep.subr.bf16.mxu0 0
  %283 = vmatpush1.bf16.msra.mxu0 %v247
  %284 = vmatprep.subr.bf16.mxu0 0
  %285 = vmatpush1.bf16.msra.mxu0 %v248
  %286 = vmatprep.subr.bf16.mxu0 0
  %287 = vmatpush1.bf16.msra.mxu0 %v249
  %288 = vmatprep.subr.bf16.mxu0 0
  %289 = vmatpush1.bf16.msra.mxu0 %v250
  %290 = vmatprep.subr.bf16.mxu0 0
  %291 = vmatpush1.bf16.msra.mxu0 %v251
  %292 = vmatprep.subr.bf16.mxu0 0
  %293 = vmatpush1.bf16.msra.mxu0 %v252
  %294 = vmatprep.subr.bf16.mxu0 0
  %295 = vmatpush1.bf16.msra.mxu0 %v253
  %296 = vmatprep.subr.bf16.mxu0 0
  %297 = vmatpush1.bf16.msra.mxu0 %v254
  %298 = vmatprep.subr.bf16.mxu0 0
  %299 = vmatpush1.bf16.msra.mxu0 %v255
  %300 = vmatprep.subr.bf16.mxu0 0
  %301 = vmatpush1.bf16.msra.mxu0 %v256
  %302 = vmatprep.subr.bf16.mxu0 0
  %303 = vmatpush1.bf16.msra.mxu0 %v257
  %304 = vmatprep.subr.bf16.mxu0 0
  %305 = vmatpush1.bf16.msra.mxu0 %v258
  %306 = vmatprep.subr.bf16.mxu0 0
  %307 = vmatpush1.bf16.msra.mxu0 %v259
  %308 = vmatprep.mubr.bf16.mxu0 %v140
  %309 = vmatmul.mubr.bf16.gmra.mrb[0].mxu0 %v126
  %v310 = vpop.f32.mrb[0].mxu0
  %v311 = vadd.f32 %v176, %v310
  %v312 = vpop.f32.mrb[0].mxu0
  %v313 = vpop.f32.mrb[0].mxu0
  %v314 = vadd.f32 %v177, %v313
  %v315 = vpop.f32.mrb[0].mxu0
  %316 = vmatprep.mubr.bf16.mxu0 %v141
  %317 = vmatmul.mubr.bf16.gmra.mrb[0].mxu0 %v127
  %v318 = vpop.f32.mrb[0].mxu0
  %v319 = vadd.f32 %v178, %v318
  %v320 = vpop.f32.mrb[0].mxu0
  %v321 = vpop.f32.mrb[0].mxu0
  %v322 = vadd.f32 %v179, %v321
  %v323 = vpop.f32.mrb[0].mxu0
  %324 = vdwg.mxu0
  %v325 = vmax.f32 %v311, 0.0
  %v326 = vmax.f32 %v314, 0.0
  %v327 = vmax.f32 %v319, 0.0
  %v328 = vmax.f32 %v322, 0.0
  %v329 = vpack.c.bf16 %v326, %v325
  %v330 = vpack.c.bf16 %v328, %v327
  %v331 = vld [vmem:[%s9] sm:$0xf]
  %v332 = vld [vmem:[%s9 + $0x4] sm:$0xf]
  %v333 = vld [vmem:[%s9 + $0x8] sm:$0xf]
  %v334 = vld [vmem:[%s9 + $0xc] sm:$0xf]
  %v335 = vld [vmem:[%s9 + $0x10] sm:$0xf]
  %v336 = vld [vmem:[%s9 + $0x14] sm:$0xf]
  %v337 = vld [vmem:[%s9 + $0x18] sm:$0xf]
  %v338 = vld [vmem:[%s9 + $0x1c] sm:$0xf]
  %v339 = vld [vmem:[%s9 + $0x20] sm:$0xf]
  %v340 = vld [vmem:[%s9 + $0x24] sm:$0xf]
  %v341 = vld [vmem:[%s9 + $0x28] sm:$0xf]
  %v342 = vld [vmem:[%s9 + $0x2c] sm:$0xf]
  %v343 = vld [vmem:[%s9 + $0x30] sm:$0xf]
  %v344 = vld [vmem:[%s9 + $0x34] sm:$0xf]
  %v345 = vld [vmem:[%s9 + $0x38] sm:$0xf]
  %v346 = vld [vmem:[%s9 + $0x3c] sm:$0xf]
  %v363 = vunpack.c.l.b16 %v331
  %v364 = vunpack.c.l.b16 %v332
  %v365 = vunpack.c.l.b16 %v333
  %v366 = vunpack.c.l.b16 %v334
  %v367 = vunpack.c.l.b16 %v335
  %v368 = vunpack.c.l.b16 %v336
  %v369 = vunpack.c.l.b16 %v337
  %v370 = vunpack.c.l.b16 %v338
  %v371 = vunpack.c.l.b16 %v339
  %v372 = vunpack.c.l.b16 %v340
  %v373 = vunpack.c.l.b16 %v341
  %v374 = vunpack.c.l.b16 %v342
  %v375 = vunpack.c.l.b16 %v343
  %v376 = vunpack.c.l.b16 %v344
  %v377 = vunpack.c.l.b16 %v345
  %v378 = vunpack.c.l.b16 %v346
  %v379 = vpack.c.b16 %v364, %v363
  %v380 = vpack.c.b16 %v366, %v365
  %v381 = vpack.c.b16 %v368, %v367
  %v382 = vpack.c.b16 %v370, %v369
  %v383 = vpack.c.b16 %v372, %v371
  %v384 = vpack.c.b16 %v374, %v373
  %v385 = vpack.c.b16 %v376, %v375
  %v386 = vpack.c.b16 %v378, %v377
  %395 = vmatprep.subr.bf16.mxu0 0
  %396 = vmatpush1.bf16.msra.mxu0 %v379
  %397 = vmatprep.subr.bf16.mxu0 0
  %398 = vmatpush1.bf16.msra.mxu0 %v380
  %399 = vmatprep.subr.bf16.mxu0 0
  %400 = vmatpush1.bf16.msra.mxu0 %v381
  %401 = vmatprep.subr.bf16.mxu0 0
  %402 = vmatpush1.bf16.msra.mxu0 %v382
  %403 = vmatprep.subr.bf16.mxu0 0
  %404 = vmatpush1.bf16.msra.mxu0 %v383
  %405 = vmatprep.subr.bf16.mxu0 0
  %406 = vmatpush1.bf16.msra.mxu0 %v384
  %407 = vmatprep.subr.bf16.mxu0 0
  %408 = vmatpush1.bf16.msra.mxu0 %v385
  %409 = vmatprep.subr.bf16.mxu0 0
  %410 = vmatpush1.bf16.msra.mxu0 %v386
  %411 = vmatprep.subr.bf16.mxu0 0
  %412 = vmatpush1.bf16.msra.mxu0 0
  %413 = vmatprep.subr.bf16.mxu0 0
  %414 = vmatpush1.bf16.msra.mxu0 0
  %415 = vmatprep.subr.bf16.mxu0 0
  %416 = vmatpush1.bf16.msra.mxu0 0
  %417 = vmatprep.subr.bf16.mxu0 0
  %418 = vmatpush1.bf16.msra.mxu0 0
  %419 = vmatprep.subr.bf16.mxu0 0
  %420 = vmatpush1.bf16.msra.mxu0 0
  %421 = vmatprep.subr.bf16.mxu0 0
  %422 = vmatpush1.bf16.msra.mxu0 0
  %423 = vmatprep.subr.bf16.mxu0 0
  %424 = vmatpush1.bf16.msra.mxu0 0
  %425 = vmatprep.subr.bf16.mxu0 0
  %426 = vmatpush1.bf16.msra.mxu0 0
  %427 = vmatprep.mubr.bf16.mxu0 0
  %428 = vmatmul.mubr.bf16.gmra.mrb[0].mxu0 %v329
  %v429 = vpop.f32.mrb[0].mxu0
  %v430 = vadd.f32 0.0, %v429
  %v431 = vpop.f32.mrb[0].mxu0
  %v432 = vpop.f32.mrb[0].mxu0
  %v433 = vadd.f32 0.0, %v432
  %v434 = vpop.f32.mrb[0].mxu0
  %435 = vmatprep.mubr.bf16.mxu0 0
  %436 = vmatmul.mubr.bf16.gmra.mrb[0].mxu0 %v330
  %v437 = vpop.f32.mrb[0].mxu0
  %v438 = vadd.f32 0.0, %v437
  %v439 = vpop.f32.mrb[0].mxu0
  %v440 = vpop.f32.mrb[0].mxu0
  %v441 = vadd.f32 0.0, %v440
  %v442 = vpop.f32.mrb[0].mxu0
  %443 = vdwg.mxu0
  %v444 = vsub.f32 %v40, %v430
  %v445 = vsub.f32 %v41, %v433
  %v446 = vsub.f32 %v42, %v438
  %v447 = vsub.f32 %v43, %v441
  %v448 = vand.u32 2147483647, %v444
  %v449 = vand.u32 2147483647, %v445
  %v450 = vand.u32 2147483647, %v446
  %v451 = vand.u32 2147483647, %v447
  %v452 = vadd.f32 %v448, %v449
  %v453 = vadd.f32 %v452, %v450
  %v454 = vadd.f32 %v453, %v451
  %v455 = vrot.slane %v454, 4
  %v456 = vadd.f32 %v454, %v455
  %v457 = vrot.slane %v456, 2
  %v458 = vadd.f32 %v456, %v457
  %v459 = vrot.slane %v458, 1
  %v460 = vadd.f32 %v458, %v459
  %461 = vst [vmem:[%s10] sm:$0x1] %v460
  // Predicated region
  $region42: #{gaussian_diffusion_loss.1} parent=0 // pred_check
    _
  $region43: #{gaussian_diffusion_loss.1} parent=0 // pred_check_branch
    %463 = sbr.rel (0) target = $region45
  $region44: #{gaussian_diffusion_loss.1} parent=0 // pred_region
    _
  $region45: #{gaussian_diffusion_loss.1} parent=0 // pred_fallthru
    _
  // Predicated region
  $region46: #{gaussian_diffusion_loss.1} parent=0 // pred_check
    _
  $region47: #{gaussian_diffusion_loss.1} parent=0 // pred_check_branch
    %465 = sbr.rel (0) target = $region49
  $region48: #{gaussian_diffusion_loss.1} parent=0 // pred_region
    _
  $region49: #{gaussian_diffusion_loss.1} parent=0 // pred_fallthru
    _

</llo_original>
